<compile_context>
chip_gen: v7x
topology: tpu7x:2x2x1
jax: 0.10.0
libtpu: 0.0.40
codegen_flags: <defaults>
</compile_context>

<pallas_src>
import jax
import jax.numpy as jnp
import numpy as np
from jax.experimental import pallas as pl
from jax.experimental.pallas import tpu as pltpu

LANE = 128


def _copy_kernel(x_ref, o_ref):
    # Elementwise copy of the current VMEM tile (one vld + one vst per vreg).
    o_ref[...] = x_ref[...]


def identity_forward(x: jax.Array) -> jax.Array:
    """Exact Identity.forward: return x. No kernel, no copy, no HBM traffic."""
    return x


def identity_pallas_copy(
    x: jax.Array,
    *,
    tile_bytes: int = 2 * 1024 * 1024,
    donate: bool = False,
) -> jax.Array:
    """Materialized identity copy via a Pallas streaming-copy kernel.

    Set donate=True (caller must not use `x` afterwards) to alias the input
    buffer to the output and avoid allocating a second HBM buffer.
    """
    orig_shape = x.shape
    dt = x.dtype
    n = x.size
    if n == 0:
        return x
    itemsize = np.dtype(dt).itemsize
    aliases = {0: 0} if donate else {}

    if n % LANE == 0:
        # Primary path: view the (contiguous) array as a lane-dense 2D slab.
        rows = n // LANE
        x2d = x.reshape(rows, LANE)          # contiguous reshape: no data movement
        # Rows per ~tile_bytes block, rounded to 32 sublanes (covers the
        # 8 / 16 / 32 sublane minimum for f32 / bf16 / int8).
        tile_r = max(32, (tile_bytes // (LANE * itemsize)) // 32 * 32)
        if tile_r >= rows:
            tile_r = rows                    # full-dim block: exempt from (8,128) rule
        grid = (pl.cdiv(rows, tile_r),)      # ragged last block handled by Pallas
        out = pl.pallas_call(
            _copy_kernel,
            out_shape=jax.ShapeDtypeStruct((rows, LANE), dt),
            grid=grid,
            in_specs=[pl.BlockSpec((tile_r, LANE), lambda i: (i, 0))],
            out_specs=pl.BlockSpec((tile_r, LANE), lambda i: (i, 0)),
            input_output_aliases=aliases,
            compiler_params=pltpu.CompilerParams(
                dimension_semantics=("parallel",)),
        )(x2d)
        return out.reshape(orig_shape)

    # Fallback (size not divisible by 128): keep the original shape, use
    # full-extent trailing dims (exempt from the (8,128) rule) and tile only
    # the leading axis when there are >= 3 dims.
    nd = x.ndim
    if nd == 0:
        x2 = x.reshape(1, 1)
        out = pl.pallas_call(
            _copy_kernel,
            out_shape=jax.ShapeDtypeStruct((1, 1), dt),
            grid=(1,),
            in_specs=[pl.BlockSpec((1, 1), lambda i: (0, 0))],
            out_specs=pl.BlockSpec((1, 1), lambda i: (0, 0)),
            input_output_aliases=aliases,
        )(x2)
        return out.reshape(orig_shape)

    trailing = int(np.prod(orig_shape[1:])) if nd > 1 else 1
    if nd >= 3:
        tile_n = max(1, tile_bytes // max(1, trailing * itemsize))
        tile_n = min(tile_n, orig_shape[0])
    else:
        tile_n = orig_shape[0]               # single full block for 1-D / 2-D
    block = (tile_n,) + tuple(orig_shape[1:])
    grid = (pl.cdiv(orig_shape[0], tile_n),)
    index_map = lambda i, _nd=nd: (i,) + (0,) * (_nd - 1)
    out = pl.pallas_call(
        _copy_kernel,
        out_shape=jax.ShapeDtypeStruct(orig_shape, dt),
        grid=grid,
        in_specs=[pl.BlockSpec(block, index_map)],
        out_specs=pl.BlockSpec(block, index_map),
        input_output_aliases=aliases,
        compiler_params=pltpu.CompilerParams(
            dimension_semantics=("parallel",)),
    )(x)
    return out


if __name__ == "__main__":
    key = jax.random.PRNGKey(0)
    # NCHW input, small shapes: batch=2, channels=4, spatial=16x16
    x = jax.random.normal(key, (2, 4, 16, 16), dtype=jnp.float32)

    # True forward path (what the PyTorch module does): zero-cost, no kernel.
    y_fwd = identity_forward(x)
    assert y_fwd is x

    # Materialized Pallas copy path (for when a fresh buffer is required).
    y = jax.block_until_ready(identity_pallas_copy(x))

    assert y.shape == x.shape, (y.shape, x.shape)
    assert y.dtype == x.dtype
    assert bool(jnp.all(y == x)), "Identity kernel output mismatch"

    # TODO(synk): init_weight/_initialize_weights are no-ops here (the module
    # has no Conv2d/BatchNorm2d children), so nothing to translate.

    print("KERNEL_OK")
</pallas_src>

<mosaic_0001>
module attributes {stable_mosaic.version = 11 : i64} {
  func.func @_copy_kernel(%arg0: i32, %arg1: memref<16x128xf32, #tpu.memory_space<vmem>>, %arg2: memref<16x128xf32, #tpu.memory_space<vmem>>) attributes {dimension_semantics = [#tpu.dimension_semantics<parallel>], iteration_bounds = array<i64: 1>, scalar_prefetch = 0 : i64, scratch_operands = 0 : i64, tpu.core_type = #tpu.core_type<tc>, window_params = [{transform_indices = @transform_0, window_bounds = array<i64: 16, 128>}, {transform_indices = @transform_1, window_bounds = array<i64: 16, 128>}]} {
    %c0 = arith.constant 0 : index
    %c0_0 = arith.constant 0 : index
    %0 = vector.load %arg1[%c0, %c0_0] : memref<16x128xf32, #tpu.memory_space<vmem>>, vector<16x128xf32>
    %c0_1 = arith.constant 0 : index
    %c0_2 = arith.constant 0 : index
    %1 = vector.load %arg2[%c0_1, %c0_2] : memref<16x128xf32, #tpu.memory_space<vmem>>, vector<16x128xf32>
    tpu.vector_store %arg2[%c0_1, %c0_2], %0 {strides = array<i32>} : memref<16x128xf32, #tpu.memory_space<vmem>>, vector<16x128xf32>,
    return
  }
  func.func @transform_0(%arg0: i32) -> (i32, i32) {
    %c0_i32 = arith.constant 0 : i32
    %c0_i32_0 = arith.constant 0 : i32
    return %arg0, %c0_i32 : i32, i32
  }
  func.func @transform_1(%arg0: i32) -> (i32, i32) {
    %c0_i32 = arith.constant 0 : i32
    %c0_i32_0 = arith.constant 0 : i32
    return %arg0, %c0_i32 : i32, i32
  }
}

</mosaic_0001>

<llo_original>
// kernel: tpu_custom_call.1
$region0: #{tpu_custom_call.1}
  #allocation0 [shape = 'u32[]', space=smem, size = 0x4, offset = 0x4, fixed_abs, tag = 'smem constant byte address 0x4 - core index']
  #allocation1 [shape = 'u32[144,128]{1,0:T(1,128)}', space=vmem, size = 0x12000, scoped, tag = 'internal scratch']
  %s0 = inlined_call_operand.hbm [shape: f32[16,128], index: 0, kind: input, shape index: {}]
  %s1 = inlined_call_operand.hbm [shape: f32[16,128], index: 1, kind: output, shape index: {}]
  %s2 = sld [smem:[#allocation0]]
  $region18: #{tpu_custom_call.1} parent=0
    _
  %s4 = ssub.s32 1, %s2
  %s5 = scalar_select 0, %s4, %s2
  $region1: #{tpu_custom_call.1} parent=0
    #allocation2 [shape = 'u8[8192]{0}', space=vmem, size = 0x2000, scoped, tag = 'input window, operand 0, single buffered']
    #allocation3 [shape = 's32[1]{0}', space=sflag, size = 0x4, scoped, tag = 'scoped memory for tpu_custom_call.1']
    #allocation4 [shape = 's32[1]{0}', space=sflag, size = 0x4, scoped, tag = 'scoped memory for tpu_custom_call.1']
    #allocation5 [shape = 'u8[8192]{0}', space=vmem, size = 0x2000, scoped, tag = 'output window, operand 0, single buffered']
    %6 = vsyncpa [#allocation3], 0
    %7 = vsyncpa [#allocation4], 0
    // Predicated region
    $region2: #{tpu_custom_call.1} parent=1 // pred_check
      _
    $region3: #{tpu_custom_call.1} parent=1 // pred_check_branch
      %9 = sbr.rel (0) target = $region5
    $region4: #{tpu_custom_call.1} parent=1 // pred_region
      %s11 = ssub.s32 256, 256
      %12 = vsyncadd [#allocation3], %s11
      %s13 = sshll.u32 [#allocation2], 4
      %s14 = int_to_ptr.vmem [resolvable:$true] %s13
      %19 = dma.hbm_to_vmem [thread:$0]  %s0, 256, %s14, [#allocation3], 128, 128, 8
    $region5: #{tpu_custom_call.1} parent=1 // pred_fallthru
      _
    // Predicated region
    $region6: #{tpu_custom_call.1} parent=1 // pred_check
      _
    $region7: #{tpu_custom_call.1} parent=1 // pred_check_branch
      %21 = sbr.rel (0) target = $region9
    $region8: #{tpu_custom_call.1} parent=1 // pred_region
      %22 = dma.done [#allocation3], 256
    $region9: #{tpu_custom_call.1} parent=1 // pred_fallthru
      _
    %v23 = vld [vmem:[#allocation2] sm:$0xff]
    %v24 = vld [vmem:[#allocation2 + $0x8] sm:$0xff]
    %25 = vst [vmem:[#allocation5] sm:$0xff] %v23
    %26 = vst [vmem:[#allocation5 + $0x8] sm:$0xff] %v24
    // Predicated region
    $region10: #{tpu_custom_call.1} parent=1 // pred_check
      _
    $region11: #{tpu_custom_call.1} parent=1 // pred_check_branch
      %28 = sbr.rel (0) target = $region13
    $region12: #{tpu_custom_call.1} parent=1 // pred_region
      %s30 = ssub.s32 256, 256
      %31 = vsyncadd [#allocation4], %s30
      %s32 = sshll.u32 [#allocation5], 4
      %s33 = int_to_ptr.vmem [resolvable:$true] %s32
      %38 = dma.vmem_to_hbm [thread:$0]  %s33, 256, %s1, [#allocation4], 128, 128, 8
    $region13: #{tpu_custom_call.1} parent=1 // pred_fallthru
      _
    // Predicated region
    $region14: #{tpu_custom_call.1} parent=1 // pred_check
      _
    $region15: #{tpu_custom_call.1} parent=1 // pred_check_branch
      %40 = sbr.rel (0) target = $region17
    $region16: #{tpu_custom_call.1} parent=1 // pred_region
      %41 = dma.done [#allocation4], 256
    $region17: #{tpu_custom_call.1} parent=1 // pred_fallthru
      _
    %42 = vsyncpa [#allocation3], 1
    %43 = vsyncpa [#allocation4], 1

</llo_original>
